<compile_context>
chip_gen: v7x
topology: tpu7x:2x2x1
jax: 0.10.0
libtpu: 0.0.40
codegen_flags: <defaults>
</compile_context>

<pallas_src>
import jax
import jax.numpy as jnp
from jax.experimental import pallas as pl
from jax.experimental.pallas import tpu as pltpu

LANE = 128     # last dim of every tile should be a multiple of this
SUBLANE = 8    # second-to-last dim multiple


def _round_up(x, m):
    return (x + m - 1) // m * m


# ---------------------------------------------------------------------------
# Kernel: one batch tile of the fused 4-layer MLP. Everything stays in VMEM,
# matmuls hit the MXU with f32 accumulation, ReLUs are VPU elementwise ops.
# ---------------------------------------------------------------------------
def dynamics_net_kernel(
    x_ref,
    w_in_ref, b_in_ref,
    w_h0_ref, b_h0_ref,
    w_h1_ref, b_h1_ref,
    w_out_ref, b_out_ref,
    o_ref,
):
    cdt = w_in_ref.dtype          # compute dtype of the MXU operands (f32 or bf16)
    x = x_ref[...]

    # input_layer (no activation in the reference forward)
    h = jnp.dot(x, w_in_ref[...], preferred_element_type=jnp.float32) + b_in_ref[...]

    # h0 -> ReLU
    h = jnp.dot(h.astype(cdt), w_h0_ref[...], preferred_element_type=jnp.float32) + b_h0_ref[...]
    h = jnp.maximum(h, 0.0)

    # h1 -> ReLU
    h = jnp.dot(h.astype(cdt), w_h1_ref[...], preferred_element_type=jnp.float32) + b_h1_ref[...]
    h = jnp.maximum(h, 0.0)

    # output_layer (lane-dense padded output; real columns sliced in the wrapper)
    y = jnp.dot(h.astype(cdt), w_out_ref[...], preferred_element_type=jnp.float32) + b_out_ref[...]
    o_ref[...] = y.astype(o_ref.dtype)


# ---------------------------------------------------------------------------
# Parameter prep: zero-pad every feature dim to a multiple of 128 lanes and
# cast weights to the compute dtype. Biases stay f32 (added after f32 accum).
# Padding happens ONCE here, not per forward call.
# ---------------------------------------------------------------------------
def prepare_params(params, compute_dtype=jnp.float32):
    def pad_w(w):
        ki, ko = w.shape
        return jnp.pad(
            w, ((0, _round_up(ki, LANE) - ki), (0, _round_up(ko, LANE) - ko))
        ).astype(compute_dtype)

    def pad_b(b):
        b = b.reshape(1, -1)
        o = b.shape[-1]
        return jnp.pad(b, ((0, 0), (0, _round_up(o, LANE) - o))).astype(jnp.float32)

    return dict(
        w_in=pad_w(params["w_in"]), b_in=pad_b(params["b_in"]),
        w_h0=pad_w(params["w_h0"]), b_h0=pad_b(params["b_h0"]),
        w_h1=pad_w(params["w_h1"]), b_h1=pad_b(params["b_h1"]),
        w_out=pad_w(params["w_out"]), b_out=pad_b(params["b_out"]),
    )


# ---------------------------------------------------------------------------
# Wrapper: batch-tiled pallas_call.
# ---------------------------------------------------------------------------
def dynamics_net_forward(x, padded, out_dim, *, batch_tile=512):
    """x: (B, input_dim) f32. padded: dict from prepare_params(). out_dim: true
    (unpadded) output width. Returns (B, out_dim) f32."""
    compute_dtype = padded["w_in"].dtype
    B, in_dim = x.shape
    in_p = padded["w_in"].shape[0]
    hid_p = padded["w_h0"].shape[0]
    out_p = padded["w_out"].shape[1]

    # Batch tiling: tile must be a multiple of 8 sublanes; pad B to whole tiles.
    tb = min(_round_up(batch_tile, SUBLANE), _round_up(B, SUBLANE))
    B_pad = _round_up(B, tb)
    n_tiles = B_pad // tb

    # Zero-pad batch rows and feature columns (padded weight rows are zero, so
    # the extra input columns contribute nothing; padded rows are sliced away).
    x_p = jnp.pad(x, ((0, B_pad - B), (0, in_p - in_dim))).astype(compute_dtype)

    # Advisory cost estimate for XLA scheduling around the custom call.
    flops = 2 * B_pad * (in_p * hid_p + 2 * hid_p * hid_p + hid_p * out_p)
    param_bytes = sum(int(v.size) * v.dtype.itemsize for v in padded.values())
    bytes_accessed = int(x_p.size) * x_p.dtype.itemsize + param_bytes + B_pad * out_p * 4
    cost = pl.CostEstimate(flops=flops, transcendentals=0, bytes_accessed=bytes_accessed)

    # VMEM budget: double-buffered x / out tiles + (conservatively doubled)
    # resident weights, with headroom; floor 16 MiB, cap 48 MiB (< v7x's 64 MiB).
    bpe = jnp.dtype(compute_dtype).itemsize
    vmem_needed = 2 * tb * in_p * bpe + 2 * tb * out_p * 4 + 2 * param_bytes
    vmem_limit = int(min(max(2 * vmem_needed + (4 << 20), 16 << 20), 48 << 20))

    # Constant block index -> Pallas keeps these VMEM-resident (no re-DMA per tile).
    resident = lambda shape: pl.BlockSpec(shape, lambda i: (0, 0))

    out = pl.pallas_call(
        dynamics_net_kernel,
        out_shape=jax.ShapeDtypeStruct((B_pad, out_p), jnp.float32),
        grid_spec=pltpu.PrefetchScalarGridSpec(
            num_scalar_prefetch=0,
            grid=(n_tiles,),
            in_specs=[
                pl.BlockSpec((tb, in_p), lambda i: (i, 0)),          # x streams per tile
                resident(padded["w_in"].shape), resident(padded["b_in"].shape),
                resident(padded["w_h0"].shape), resident(padded["b_h0"].shape),
                resident(padded["w_h1"].shape), resident(padded["b_h1"].shape),
                resident(padded["w_out"].shape), resident(padded["b_out"].shape),
            ],
            out_specs=pl.BlockSpec((tb, out_p), lambda i: (i, 0)),   # lane-dense output
        ),
        compiler_params=pltpu.CompilerParams(
            dimension_semantics=("parallel",),   # shard batch tiles across TCs on v7x
            vmem_limit_bytes=vmem_limit,
        ),
        cost_estimate=cost,
    )(
        x_p,
        padded["w_in"], padded["b_in"],
        padded["w_h0"], padded["b_h0"],
        padded["w_h1"], padded["b_h1"],
        padded["w_out"], padded["b_out"],
    )
    return out[:B, :out_dim]


# ---------------------------------------------------------------------------
# Init (mimics nn.Linear's U(-1/sqrt(fan_in), 1/sqrt(fan_in))) and pure-JAX ref.
# ---------------------------------------------------------------------------
def init_params(key, input_dim, output_dim, n_neurons):
    def linear(k, fan_in, fan_out):
        kw, kb = jax.random.split(k)
        bound = 1.0 / jnp.sqrt(fan_in)
        w = jax.random.uniform(kw, (fan_in, fan_out), jnp.float32, -bound, bound)
        b = jax.random.uniform(kb, (1, fan_out), jnp.float32, -bound, bound)
        return w, b

    k0, k1, k2, k3 = jax.random.split(key, 4)
    w_in, b_in = linear(k0, input_dim, n_neurons)
    w_h0, b_h0 = linear(k1, n_neurons, n_neurons)
    w_h1, b_h1 = linear(k2, n_neurons, n_neurons)
    w_out, b_out = linear(k3, n_neurons, output_dim)
    return dict(w_in=w_in, b_in=b_in, w_h0=w_h0, b_h0=b_h0,
                w_h1=w_h1, b_h1=b_h1, w_out=w_out, b_out=b_out)


def reference_forward(x, p):
    h = x @ p["w_in"] + p["b_in"]
    h = jnp.maximum(h @ p["w_h0"] + p["b_h0"], 0.0)
    h = jnp.maximum(h @ p["w_h1"] + p["b_h1"], 0.0)
    return h @ p["w_out"] + p["b_out"]


if __name__ == "__main__":
    # Small shapes implied by the module: DynamicsNet(input_dim, output_dim, n_neurons, ReLU)
    batch, input_dim, output_dim, n_neurons = 8, 16, 8, 32

    key = jax.random.PRNGKey(0)
    kx, kx2, kp = jax.random.split(key, 3)
    x = jax.random.normal(kx, (batch, input_dim), jnp.float32)
    params = init_params(kp, input_dim, output_dim, n_neurons)
    ref = reference_forward(x, params)

    # f32 compute path (tight tolerance vs pure-JAX reference).
    padded_f32 = prepare_params(params, jnp.float32)
    out = jax.block_until_ready(dynamics_net_forward(x, padded_f32, output_dim))
    assert out.shape == (batch, output_dim)
    assert jnp.allclose(out, ref, atol=1e-4, rtol=1e-4)

    # Batch-tiled path: batch not a multiple of the tile -> padded batch, grid > 1.
    B2 = 300
    x2 = jax.random.normal(kx2, (B2, input_dim), jnp.float32)
    out2 = jax.block_until_ready(
        dynamics_net_forward(x2, padded_f32, output_dim, batch_tile=128))
    assert out2.shape == (B2, output_dim)
    assert jnp.allclose(out2, reference_forward(x2, params), atol=1e-4, rtol=1e-4)

    # bf16 operands / f32 accumulation path (MXU-native on v5e/v6e/v7x).
    padded_bf16 = prepare_params(params, jnp.bfloat16)
    out_bf16 = jax.block_until_ready(dynamics_net_forward(x, padded_bf16, output_dim))
    assert jnp.allclose(out_bf16, ref, atol=5e-2, rtol=5e-2)

    print("KERNEL_OK")
</pallas_src>

<mosaic_0001>
module attributes {stable_mosaic.version = 11 : i64} {
  func.func @dynamics_net_kernel(%arg0: i32, %arg1: memref<8x128xf32, #tpu.memory_space<vmem>>, %arg2: memref<128x128xf32, #tpu.memory_space<vmem>>, %arg3: memref<1x128xf32, #tpu.memory_space<vmem>>, %arg4: memref<128x128xf32, #tpu.memory_space<vmem>>, %arg5: memref<1x128xf32, #tpu.memory_space<vmem>>, %arg6: memref<128x128xf32, #tpu.memory_space<vmem>>, %arg7: memref<1x128xf32, #tpu.memory_space<vmem>>, %arg8: memref<128x128xf32, #tpu.memory_space<vmem>>, %arg9: memref<1x128xf32, #tpu.memory_space<vmem>>, %arg10: memref<8x128xf32, #tpu.memory_space<vmem>>) attributes {dimension_semantics = [#tpu.dimension_semantics<parallel>], iteration_bounds = array<i64: 1>, scalar_prefetch = 0 : i64, scratch_operands = 0 : i64, tpu.core_type = #tpu.core_type<tc>, window_params = [{transform_indices = @transform_0, window_bounds = array<i64: 8, 128>}, {pipeline_mode = #tpu.pipeline_mode<synchronous>, transform_indices = @transform_1, window_bounds = array<i64: 128, 128>}, {pipeline_mode = #tpu.pipeline_mode<synchronous>, transform_indices = @transform_2, window_bounds = array<i64: 1, 128>}, {pipeline_mode = #tpu.pipeline_mode<synchronous>, transform_indices = @transform_3, window_bounds = array<i64: 128, 128>}, {pipeline_mode = #tpu.pipeline_mode<synchronous>, transform_indices = @transform_4, window_bounds = array<i64: 1, 128>}, {pipeline_mode = #tpu.pipeline_mode<synchronous>, transform_indices = @transform_5, window_bounds = array<i64: 128, 128>}, {pipeline_mode = #tpu.pipeline_mode<synchronous>, transform_indices = @transform_6, window_bounds = array<i64: 1, 128>}, {pipeline_mode = #tpu.pipeline_mode<synchronous>, transform_indices = @transform_7, window_bounds = array<i64: 128, 128>}, {pipeline_mode = #tpu.pipeline_mode<synchronous>, transform_indices = @transform_8, window_bounds = array<i64: 1, 128>}, {transform_indices = @transform_9, window_bounds = array<i64: 8, 128>}]} {
    %c0 = arith.constant 0 : index
    %c0_0 = arith.constant 0 : index
    %0 = vector.load %arg1[%c0, %c0_0] : memref<8x128xf32, #tpu.memory_space<vmem>>, vector<8x128xf32>
    %c0_1 = arith.constant 0 : index
    %c0_2 = arith.constant 0 : index
    %1 = vector.load %arg2[%c0_1, %c0_2] : memref<128x128xf32, #tpu.memory_space<vmem>>, vector<128x128xf32>
    %cst = arith.constant dense<0.000000e+00> : vector<8x128xf32>
    %2 = tpu.matmul %0, %1, %cst {dimension_numbers = #tpu.dot_dimension_numbers<[1], [0], [0], [1], [0, 0, 1, 1], [], []>} : vector<8x128xf32>, vector<128x128xf32>, vector<8x128xf32> -> vector<8x128xf32>
    %c0_3 = arith.constant 0 : index
    %c0_4 = arith.constant 0 : index
    %3 = vector.load %arg3[%c0_3, %c0_4] : memref<1x128xf32, #tpu.memory_space<vmem>>, vector<1x128xf32>
    %4 = vector.broadcast %3 : vector<1x128xf32> to vector<8x128xf32>
    %5 = arith.addf %2, %4 : vector<8x128xf32>
    %c0_5 = arith.constant 0 : index
    %c0_6 = arith.constant 0 : index
    %6 = vector.load %arg4[%c0_5, %c0_6] : memref<128x128xf32, #tpu.memory_space<vmem>>, vector<128x128xf32>
    %cst_7 = arith.constant dense<0.000000e+00> : vector<8x128xf32>
    %7 = tpu.matmul %5, %6, %cst_7 {dimension_numbers = #tpu.dot_dimension_numbers<[1], [0], [0], [1], [0, 0, 1, 1], [], []>} : vector<8x128xf32>, vector<128x128xf32>, vector<8x128xf32> -> vector<8x128xf32>
    %c0_8 = arith.constant 0 : index
    %c0_9 = arith.constant 0 : index
    %8 = vector.load %arg5[%c0_8, %c0_9] : memref<1x128xf32, #tpu.memory_space<vmem>>, vector<1x128xf32>
    %9 = vector.broadcast %8 : vector<1x128xf32> to vector<8x128xf32>
    %10 = arith.addf %7, %9 : vector<8x128xf32>
    %cst_10 = arith.constant 0.000000e+00 : f32
    %11 = vector.broadcast %cst_10 : f32 to vector<8x128xf32>
    %12 = arith.maximumf %10, %11 : vector<8x128xf32>
    %c0_11 = arith.constant 0 : index
    %c0_12 = arith.constant 0 : index
    %13 = vector.load %arg6[%c0_11, %c0_12] : memref<128x128xf32, #tpu.memory_space<vmem>>, vector<128x128xf32>
    %cst_13 = arith.constant dense<0.000000e+00> : vector<8x128xf32>
    %14 = tpu.matmul %12, %13, %cst_13 {dimension_numbers = #tpu.dot_dimension_numbers<[1], [0], [0], [1], [0, 0, 1, 1], [], []>} : vector<8x128xf32>, vector<128x128xf32>, vector<8x128xf32> -> vector<8x128xf32>
    %c0_14 = arith.constant 0 : index
    %c0_15 = arith.constant 0 : index
    %15 = vector.load %arg7[%c0_14, %c0_15] : memref<1x128xf32, #tpu.memory_space<vmem>>, vector<1x128xf32>
    %16 = vector.broadcast %15 : vector<1x128xf32> to vector<8x128xf32>
    %17 = arith.addf %14, %16 : vector<8x128xf32>
    %cst_16 = arith.constant 0.000000e+00 : f32
    %18 = vector.broadcast %cst_16 : f32 to vector<8x128xf32>
    %19 = arith.maximumf %17, %18 : vector<8x128xf32>
    %c0_17 = arith.constant 0 : index
    %c0_18 = arith.constant 0 : index
    %20 = vector.load %arg8[%c0_17, %c0_18] : memref<128x128xf32, #tpu.memory_space<vmem>>, vector<128x128xf32>
    %cst_19 = arith.constant dense<0.000000e+00> : vector<8x128xf32>
    %21 = tpu.matmul %19, %20, %cst_19 {dimension_numbers = #tpu.dot_dimension_numbers<[1], [0], [0], [1], [0, 0, 1, 1], [], []>} : vector<8x128xf32>, vector<128x128xf32>, vector<8x128xf32> -> vector<8x128xf32>
    %c0_20 = arith.constant 0 : index
    %c0_21 = arith.constant 0 : index
    %22 = vector.load %arg9[%c0_20, %c0_21] : memref<1x128xf32, #tpu.memory_space<vmem>>, vector<1x128xf32>
    %23 = vector.broadcast %22 : vector<1x128xf32> to vector<8x128xf32>
    %24 = arith.addf %21, %23 : vector<8x128xf32>
    %c0_22 = arith.constant 0 : index
    %c0_23 = arith.constant 0 : index
    %25 = vector.load %arg10[%c0_22, %c0_23] : memref<8x128xf32, #tpu.memory_space<vmem>>, vector<8x128xf32>
    tpu.vector_store %arg10[%c0_22, %c0_23], %24 {strides = array<i32>} : memref<8x128xf32, #tpu.memory_space<vmem>>, vector<8x128xf32>,
    return
  }
  func.func @transform_0(%arg0: i32) -> (i32, i32) {
    %c0_i32 = arith.constant 0 : i32
    %c0_i32_0 = arith.constant 0 : i32
    return %arg0, %c0_i32 : i32, i32
  }
  func.func @transform_1(%arg0: i32) -> (i32, i32) {
    %c0_i32 = arith.constant 0 : i32
    %c0_i32_0 = arith.constant 0 : i32
    %c0_i32_1 = arith.constant 0 : i32
    return %c0_i32, %c0_i32_0 : i32, i32
  }
  func.func @transform_2(%arg0: i32) -> (i32, i32) {
    %c0_i32 = arith.constant 0 : i32
    %c0_i32_0 = arith.constant 0 : i32
    %c0_i32_1 = arith.constant 0 : i32
    return %c0_i32, %c0_i32_0 : i32, i32
  }
  func.func @transform_3(%arg0: i32) -> (i32, i32) {
    %c0_i32 = arith.constant 0 : i32
    %c0_i32_0 = arith.constant 0 : i32
    %c0_i32_1 = arith.constant 0 : i32
    return %c0_i32, %c0_i32_0 : i32, i32
  }
  func.func @transform_4(%arg0: i32) -> (i32, i32) {
    %c0_i32 = arith.constant 0 : i32
    %c0_i32_0 = arith.constant 0 : i32
    %c0_i32_1 = arith.constant 0 : i32
    return %c0_i32, %c0_i32_0 : i32, i32
  }
  func.func @transform_5(%arg0: i32) -> (i32, i32) {
    %c0_i32 = arith.constant 0 : i32
    %c0_i32_0 = arith.constant 0 : i32
    %c0_i32_1 = arith.constant 0 : i32
    return %c0_i32, %c0_i32_0 : i32, i32
  }
  func.func @transform_6(%arg0: i32) -> (i32, i32) {
    %c0_i32 = arith.constant 0 : i32
    %c0_i32_0 = arith.constant 0 : i32
    %c0_i32_1 = arith.constant 0 : i32
    return %c0_i32, %c0_i32_0 : i32, i32
  }
  func.func @transform_7(%arg0: i32) -> (i32, i32) {
    %c0_i32 = arith.constant 0 : i32
    %c0_i32_0 = arith.constant 0 : i32
    %c0_i32_1 = arith.constant 0 : i32
    return %c0_i32, %c0_i32_0 : i32, i32
  }
  func.func @transform_8(%arg0: i32) -> (i32, i32) {
    %c0_i32 = arith.constant 0 : i32
    %c0_i32_0 = arith.constant 0 : i32
    %c0_i32_1 = arith.constant 0 : i32
    return %c0_i32, %c0_i32_0 : i32, i32
  }
  func.func @transform_9(%arg0: i32) -> (i32, i32) {
    %c0_i32 = arith.constant 0 : i32
    %c0_i32_0 = arith.constant 0 : i32
    return %arg0, %c0_i32 : i32, i32
  }
}

</mosaic_0001>

<llo_original>
// kernel: tpu_custom_call.1
$region0: #{tpu_custom_call.1}
  #allocation0 [shape = 'u32[]', space=smem, size = 0x4, offset = 0x4, fixed_abs, tag = 'smem constant byte address 0x4 - core index']
  #allocation1 [shape = 'u32[144,128]{1,0:T(1,128)}', space=vmem, size = 0x12000, scoped, tag = 'internal scratch']
  %s0 = inlined_call_operand.hbm [shape: f32[8,128], index: 0, kind: input, shape index: {}]
  %s1 = inlined_call_operand.hbm [shape: f32[128,128], index: 1, kind: input, shape index: {}]
  %s2 = inlined_call_operand.vmem [shape: f32[1,128], index: 2, kind: input, shape index: {}]
  %s3 = inlined_call_operand.hbm [shape: f32[128,128], index: 3, kind: input, shape index: {}]
  %s4 = inlined_call_operand.vmem [shape: f32[1,128], index: 4, kind: input, shape index: {}]
  %s5 = inlined_call_operand.hbm [shape: f32[128,128], index: 5, kind: input, shape index: {}]
  %s6 = inlined_call_operand.vmem [shape: f32[1,128], index: 6, kind: input, shape index: {}]
  %s7 = inlined_call_operand.hbm [shape: f32[128,128], index: 7, kind: input, shape index: {}]
  %s8 = inlined_call_operand.vmem [shape: f32[1,128], index: 8, kind: input, shape index: {}]
  %s9 = inlined_call_operand.hbm [shape: f32[8,128], index: 9, kind: output, shape index: {}]
  %s10 = sld [smem:[#allocation0]]
  $region66: #{tpu_custom_call.1} parent=0
    _
  %s12 = ssub.s32 1, %s10
  %s13 = scalar_select 0, %s12, %s10
  $region1: #{tpu_custom_call.1} parent=0
    #allocation2 [shape = 'u8[4096]{0}', space=vmem, size = 0x1000, scoped, tag = 'input window, operand 0, single buffered']
    #allocation3 [shape = 's32[1]{0}', space=sflag, size = 0x4, scoped, tag = 'scoped memory for tpu_custom_call.1']
    #allocation4 [shape = 's32[1]{0}', space=sflag, size = 0x4, scoped, tag = 'scoped memory for tpu_custom_call.1']
    #allocation5 [shape = 'u8[65536]{0}', space=vmem, size = 0x10000, scoped, tag = 'input window, operand 1, single buffered']
    #allocation6 [shape = 's32[1]{0}', space=sflag, size = 0x4, scoped, tag = 'scoped memory for tpu_custom_call.1']
    #allocation7 [shape = 'u8[65536]{0}', space=vmem, size = 0x10000, scoped, tag = 'input window, operand 3, single buffered']
    #allocation8 [shape = 'u8[65536]{0}', space=vmem, size = 0x10000, scoped, tag = 'input window, operand 5, single buffered']
    #allocation9 [shape = 's32[1]{0}', space=sflag, size = 0x4, scoped, tag = 'scoped memory for tpu_custom_call.1']
    #allocation10 [shape = 'u8[65536]{0}', space=vmem, size = 0x10000, scoped, tag = 'input window, operand 7, single buffered']
    #allocation11 [shape = 'u8[4096]{0}', space=vmem, size = 0x1000, scoped, tag = 'output window, operand 0, single buffered']
    %14 = vsyncpa [#allocation3], 0
    %15 = vsyncpa [#allocation6], 0
    %16 = vsyncpa [#allocation9], 0
    %17 = vsyncpa [#allocation4], 0
    // Predicated region
    $region2: #{tpu_custom_call.1} parent=1 // pred_check
      _
    $region3: #{tpu_custom_call.1} parent=1 // pred_check_branch
      %19 = sbr.rel (0) target = $region5
    $region4: #{tpu_custom_call.1} parent=1 // pred_region
      %s21 = ssub.s32 128, 128
      %22 = vsyncadd [#allocation3], %s21
      %s24 = sshll.u32 [#allocation2], 4
      %s25 = int_to_ptr.vmem [resolvable:$true] %s24
      %27 = dma.hbm_to_vmem [thread:$0]  %s0, 128, %s25, [#allocation3]
    $region5: #{tpu_custom_call.1} parent=1 // pred_fallthru
      _
    // Predicated region
    $region6: #{tpu_custom_call.1} parent=1 // pred_check
      _
    $region7: #{tpu_custom_call.1} parent=1 // pred_check_branch
      %29 = sbr.rel (0) target = $region9
    $region8: #{tpu_custom_call.1} parent=1 // pred_region
      %s31 = ssub.s32 2048, 2048
      %32 = vsyncadd [#allocation6], %s31
      %s33 = sshll.u32 [#allocation5], 4
      %s34 = int_to_ptr.vmem [resolvable:$true] %s33
      %39 = dma.hbm_to_vmem [thread:$0]  %s1, 2048, %s34, [#allocation6], 128, 128, 8
    $region9: #{tpu_custom_call.1} parent=1 // pred_fallthru
      _
    // Predicated region
    $region10: #{tpu_custom_call.1} parent=1 // pred_check
      _
    $region11: #{tpu_custom_call.1} parent=1 // pred_check_branch
      %41 = sbr.rel (0) target = $region13
    $region12: #{tpu_custom_call.1} parent=1 // pred_region
      _
    $region13: #{tpu_custom_call.1} parent=1 // pred_fallthru
      _
    // Predicated region
    $region14: #{tpu_custom_call.1} parent=1 // pred_check
      _
    $region15: #{tpu_custom_call.1} parent=1 // pred_check_branch
      %43 = sbr.rel (0) target = $region17
    $region16: #{tpu_custom_call.1} parent=1 // pred_region
      %s45 = ssub.s32 2048, 2048
      %46 = vsyncadd [#allocation6], %s45
      %s47 = sshll.u32 [#allocation7], 4
      %s48 = int_to_ptr.vmem [resolvable:$true] %s47
      %53 = dma.hbm_to_vmem [thread:$0]  %s3, 2048, %s48, [#allocation6], 128, 128, 8
    $region17: #{tpu_custom_call.1} parent=1 // pred_fallthru
      _
    // Predicated region
    $region18: #{tpu_custom_call.1} parent=1 // pred_check
      _
    $region19: #{tpu_custom_call.1} parent=1 // pred_check_branch
      %55 = sbr.rel (0) target = $region21
    $region20: #{tpu_custom_call.1} parent=1 // pred_region
      _
    $region21: #{tpu_custom_call.1} parent=1 // pred_fallthru
      _
    // Predicated region
    $region22: #{tpu_custom_call.1} parent=1 // pred_check
      _
    $region23: #{tpu_custom_call.1} parent=1 // pred_check_branch
      %57 = sbr.rel (0) target = $region25
    $region24: #{tpu_custom_call.1} parent=1 // pred_region
      %s59 = ssub.s32 2048, 2048
      %60 = vsyncadd [#allocation9], %s59
      %s61 = sshll.u32 [#allocation8], 4
      %s62 = int_to_ptr.vmem [resolvable:$true] %s61
      %67 = dma.hbm_to_vmem [thread:$0]  %s5, 2048, %s62, [#allocation9], 128, 128, 8
    $region25: #{tpu_custom_call.1} parent=1 // pred_fallthru
      _
    // Predicated region
    $region26: #{tpu_custom_call.1} parent=1 // pred_check
      _
    $region27: #{tpu_custom_call.1} parent=1 // pred_check_branch
      %69 = sbr.rel (0) target = $region29
    $region28: #{tpu_custom_call.1} parent=1 // pred_region
      _
    $region29: #{tpu_custom_call.1} parent=1 // pred_fallthru
      _
    // Predicated region
    $region30: #{tpu_custom_call.1} parent=1 // pred_check
      _
    $region31: #{tpu_custom_call.1} parent=1 // pred_check_branch
      %71 = sbr.rel (0) target = $region33
    $region32: #{tpu_custom_call.1} parent=1 // pred_region
      %s73 = ssub.s32 2048, 2048
      %74 = vsyncadd [#allocation9], %s73
      %s75 = sshll.u32 [#allocation10], 4
      %s76 = int_to_ptr.vmem [resolvable:$true] %s75
      %81 = dma.hbm_to_vmem [thread:$0]  %s7, 2048, %s76, [#allocation9], 128, 128, 8
    $region33: #{tpu_custom_call.1} parent=1 // pred_fallthru
      _
    // Predicated region
    $region34: #{tpu_custom_call.1} parent=1 // pred_check
      _
    $region35: #{tpu_custom_call.1} parent=1 // pred_check_branch
      %83 = sbr.rel (0) target = $region37
    $region36: #{tpu_custom_call.1} parent=1 // pred_region
      _
    $region37: #{tpu_custom_call.1} parent=1 // pred_fallthru
      _
    // Predicated region
    $region38: #{tpu_custom_call.1} parent=1 // pred_check
      _
    $region39: #{tpu_custom_call.1} parent=1 // pred_check_branch
      %85 = sbr.rel (0) target = $region41
    $region40: #{tpu_custom_call.1} parent=1 // pred_region
      %86 = dma.done [#allocation3], 128
    $region41: #{tpu_custom_call.1} parent=1 // pred_fallthru
      _
    // Predicated region
    $region42: #{tpu_custom_call.1} parent=1 // pred_check
      _
    $region43: #{tpu_custom_call.1} parent=1 // pred_check_branch
      %88 = sbr.rel (0) target = $region45
    $region44: #{tpu_custom_call.1} parent=1 // pred_region
      %89 = dma.done [#allocation6], 2048
    $region45: #{tpu_custom_call.1} parent=1 // pred_fallthru
      _
    // Predicated region
    $region46: #{tpu_custom_call.1} parent=1 // pred_check
      _
    $region47: #{tpu_custom_call.1} parent=1 // pred_check_branch
      %91 = sbr.rel (0) target = $region49
    $region48: #{tpu_custom_call.1} parent=1 // pred_region
      %92 = dma.done [#allocation6], 2048
    $region49: #{tpu_custom_call.1} parent=1 // pred_fallthru
      _
    // Predicated region
    $region50: #{tpu_custom_call.1} parent=1 // pred_check
      _
    $region51: #{tpu_custom_call.1} parent=1 // pred_check_branch
      %94 = sbr.rel (0) target = $region53
    $region52: #{tpu_custom_call.1} parent=1 // pred_region
      %95 = dma.done [#allocation9], 2048
    $region53: #{tpu_custom_call.1} parent=1 // pred_fallthru
      _
    // Predicated region
    $region54: #{tpu_custom_call.1} parent=1 // pred_check
      _
    $region55: #{tpu_custom_call.1} parent=1 // pred_check_branch
      %97 = sbr.rel (0) target = $region57
    $region56: #{tpu_custom_call.1} parent=1 // pred_region
      %98 = dma.done [#allocation9], 2048
    $region57: #{tpu_custom_call.1} parent=1 // pred_fallthru
      _
    %v99 = vld [vmem:[#allocation2] sm:$0xff]
    %v100 = vld [vmem:[#allocation5] sm:$0xff]
    %v101 = vld [vmem:[#allocation5 + $0x8] sm:$0xff]
    %v102 = vld [vmem:[#allocation5 + $0x10] sm:$0xff]
    %v103 = vld [vmem:[#allocation5 + $0x18] sm:$0xff]
    %v104 = vld [vmem:[#allocation5 + $0x20] sm:$0xff]
    %v105 = vld [vmem:[#allocation5 + $0x28] sm:$0xff]
    %v106 = vld [vmem:[#allocation5 + $0x30] sm:$0xff]
    %v107 = vld [vmem:[#allocation5 + $0x38] sm:$0xff]
    %v108 = vld [vmem:[#allocation5 + $0x40] sm:$0xff]
    %v109 = vld [vmem:[#allocation5 + $0x48] sm:$0xff]
    %v110 = vld [vmem:[#allocation5 + $0x50] sm:$0xff]
    %v111 = vld [vmem:[#allocation5 + $0x58] sm:$0xff]
    %v112 = vld [vmem:[#allocation5 + $0x60] sm:$0xff]
    %v113 = vld [vmem:[#allocation5 + $0x68] sm:$0xff]
    %v114 = vld [vmem:[#allocation5 + $0x70] sm:$0xff]
    %v115 = vld [vmem:[#allocation5 + $0x78] sm:$0xff]
    %v116 = vld [vmem:[%s2] sm:$0x1]
    %v118 = vlaneseq
    %v119 = vshrl.u32 %v118, 7
    %v120 = vsub.s32 0, %v119
    %v121 = vrot.slane %v116, %v120
    %123 = vmatprep.subr.mxu0 0.0
    %124 = vmatpush1.msra.mxu0 %v100
    %125 = vmatprep.subr.mxu0 0.0
    %126 = vmatpush1.msra.mxu0 %v101
    %127 = vmatprep.subr.mxu0 0.0
    %128 = vmatpush1.msra.mxu0 %v102
    %129 = vmatprep.subr.mxu0 0.0
    %130 = vmatpush1.msra.mxu0 %v103
    %131 = vmatprep.subr.mxu0 0.0
    %132 = vmatpush1.msra.mxu0 %v104
    %133 = vmatprep.subr.mxu0 0.0
    %134 = vmatpush1.msra.mxu0 %v105
    %135 = vmatprep.subr.mxu0 0.0
    %136 = vmatpush1.msra.mxu0 %v106
    %137 = vmatprep.subr.mxu0 0.0
    %138 = vmatpush1.msra.mxu0 %v107
    %139 = vmatprep.subr.mxu0 0.0
    %140 = vmatpush1.msra.mxu0 %v108
    %141 = vmatprep.subr.mxu0 0.0
    %142 = vmatpush1.msra.mxu0 %v109
    %143 = vmatprep.subr.mxu0 0.0
    %144 = vmatpush1.msra.mxu0 %v110
    %145 = vmatprep.subr.mxu0 0.0
    %146 = vmatpush1.msra.mxu0 %v111
    %147 = vmatprep.subr.mxu0 0.0
    %148 = vmatpush1.msra.mxu0 %v112
    %149 = vmatprep.subr.mxu0 0.0
    %150 = vmatpush1.msra.mxu0 %v113
    %151 = vmatprep.subr.mxu0 0.0
    %152 = vmatpush1.msra.mxu0 %v114
    %153 = vmatprep.subr.mxu0 0.0
    %154 = vmatpush1.msra.mxu0 %v115
    %155 = vmatprep.subr.mxu0 0.0
    %156 = vmatpush1.msra.mxu0 0.0
    %157 = vmatprep.subr.mxu0 0.0
    %158 = vmatpush1.msra.mxu0 0.0
    %159 = vmatprep.subr.mxu0 0.0
    %160 = vmatpush1.msra.mxu0 0.0
    %161 = vmatprep.subr.mxu0 0.0
    %162 = vmatpush1.msra.mxu0 0.0
    %163 = vmatprep.subr.mxu0 0.0
    %164 = vmatpush1.msra.mxu0 0.0
    %165 = vmatprep.subr.mxu0 0.0
    %166 = vmatpush1.msra.mxu0 0.0
    %167 = vmatprep.subr.mxu0 0.0
    %168 = vmatpush1.msra.mxu0 0.0
    %169 = vmatprep.subr.mxu0 0.0
    %170 = vmatpush1.msra.mxu0 0.0
    %171 = vmatprep.subr.mxu0 0.0
    %172 = vmatpush1.msra.mxu0 0.0
    %173 = vmatprep.subr.mxu0 0.0
    %174 = vmatpush1.msra.mxu0 0.0
    %175 = vmatprep.subr.mxu0 0.0
    %176 = vmatpush1.msra.mxu0 0.0
    %177 = vmatprep.subr.mxu0 0.0
    %178 = vmatpush1.msra.mxu0 0.0
    %179 = vmatprep.subr.mxu0 0.0
    %180 = vmatpush1.msra.mxu0 0.0
    %181 = vmatprep.subr.mxu0 0.0
    %182 = vmatpush1.msra.mxu0 0.0
    %183 = vmatprep.subr.mxu0 0.0
    %184 = vmatpush1.msra.mxu0 0.0
    %185 = vmatprep.subr.mxu0 0.0
    %186 = vmatpush1.msra.mxu0 0.0
    %187 = vmatprep.mubr.f32.mxu0 0.0
    %188 = vmatmul.mubr.f32.gmra.mrb[0].mxu0 %v99
    %v189 = vpop.f32.mrb[0].mxu0
    %v190 = vadd.f32 %v121, %v189
    %v191 = vpop.f32.mrb[0].mxu0
    %192 = vdwg.mxu0
    %v193 = vld [vmem:[#allocation7] sm:$0xff]
    %v194 = vld [vmem:[#allocation7 + $0x8] sm:$0xff]
    %v195 = vld [vmem:[#allocation7 + $0x10] sm:$0xff]
    %v196 = vld [vmem:[#allocation7 + $0x18] sm:$0xff]
    %v197 = vld [vmem:[#allocation7 + $0x20] sm:$0xff]
    %v198 = vld [vmem:[#allocation7 + $0x28] sm:$0xff]
    %v199 = vld [vmem:[#allocation7 + $0x30] sm:$0xff]
    %v200 = vld [vmem:[#allocation7 + $0x38] sm:$0xff]
    %v201 = vld [vmem:[#allocation7 + $0x40] sm:$0xff]
    %v202 = vld [vmem:[#allocation7 + $0x48] sm:$0xff]
    %v203 = vld [vmem:[#allocation7 + $0x50] sm:$0xff]
    %v204 = vld [vmem:[#allocation7 + $0x58] sm:$0xff]
    %v205 = vld [vmem:[#allocation7 + $0x60] sm:$0xff]
    %v206 = vld [vmem:[#allocation7 + $0x68] sm:$0xff]
    %v207 = vld [vmem:[#allocation7 + $0x70] sm:$0xff]
    %v208 = vld [vmem:[#allocation7 + $0x78] sm:$0xff]
    %v209 = vld [vmem:[%s4] sm:$0x1]
    %v211 = vlaneseq
    %v212 = vshrl.u32 %v211, 7
    %v213 = vsub.s32 0, %v212
    %v214 = vrot.slane %v209, %v213
    %216 = vmatprep.subr.mxu0 0.0
    %217 = vmatpush1.msra.mxu0 %v193
    %218 = vmatprep.subr.mxu0 0.0
    %219 = vmatpush1.msra.mxu0 %v194
    %220 = vmatprep.subr.mxu0 0.0
    %221 = vmatpush1.msra.mxu0 %v195
    %222 = vmatprep.subr.mxu0 0.0
    %223 = vmatpush1.msra.mxu0 %v196
    %224 = vmatprep.subr.mxu0 0.0
    %225 = vmatpush1.msra.mxu0 %v197
    %226 = vmatprep.subr.mxu0 0.0
    %227 = vmatpush1.msra.mxu0 %v198
    %228 = vmatprep.subr.mxu0 0.0
    %229 = vmatpush1.msra.mxu0 %v199
    %230 = vmatprep.subr.mxu0 0.0
    %231 = vmatpush1.msra.mxu0 %v200
    %232 = vmatprep.subr.mxu0 0.0
    %233 = vmatpush1.msra.mxu0 %v201
    %234 = vmatprep.subr.mxu0 0.0
    %235 = vmatpush1.msra.mxu0 %v202
    %236 = vmatprep.subr.mxu0 0.0
    %237 = vmatpush1.msra.mxu0 %v203
    %238 = vmatprep.subr.mxu0 0.0
    %239 = vmatpush1.msra.mxu0 %v204
    %240 = vmatprep.subr.mxu0 0.0
    %241 = vmatpush1.msra.mxu0 %v205
    %242 = vmatprep.subr.mxu0 0.0
    %243 = vmatpush1.msra.mxu0 %v206
    %244 = vmatprep.subr.mxu0 0.0
    %245 = vmatpush1.msra.mxu0 %v207
    %246 = vmatprep.subr.mxu0 0.0
    %247 = vmatpush1.msra.mxu0 %v208
    %248 = vmatprep.subr.mxu0 0.0
    %249 = vmatpush1.msra.mxu0 0.0
    %250 = vmatprep.subr.mxu0 0.0
    %251 = vmatpush1.msra.mxu0 0.0
    %252 = vmatprep.subr.mxu0 0.0
    %253 = vmatpush1.msra.mxu0 0.0
    %254 = vmatprep.subr.mxu0 0.0
    %255 = vmatpush1.msra.mxu0 0.0
    %256 = vmatprep.subr.mxu0 0.0
    %257 = vmatpush1.msra.mxu0 0.0
    %258 = vmatprep.subr.mxu0 0.0
    %259 = vmatpush1.msra.mxu0 0.0
    %260 = vmatprep.subr.mxu0 0.0
    %261 = vmatpush1.msra.mxu0 0.0
    %262 = vmatprep.subr.mxu0 0.0
    %263 = vmatpush1.msra.mxu0 0.0
    %264 = vmatprep.subr.mxu0 0.0
    %265 = vmatpush1.msra.mxu0 0.0
    %266 = vmatprep.subr.mxu0 0.0
    %267 = vmatpush1.msra.mxu0 0.0
    %268 = vmatprep.subr.mxu0 0.0
    %269 = vmatpush1.msra.mxu0 0.0
    %270 = vmatprep.subr.mxu0 0.0
    %271 = vmatpush1.msra.mxu0 0.0
    %272 = vmatprep.subr.mxu0 0.0
    %273 = vmatpush1.msra.mxu0 0.0
    %274 = vmatprep.subr.mxu0 0.0
    %275 = vmatpush1.msra.mxu0 0.0
    %276 = vmatprep.subr.mxu0 0.0
    %277 = vmatpush1.msra.mxu0 0.0
    %278 = vmatprep.subr.mxu0 0.0
    %279 = vmatpush1.msra.mxu0 0.0
    %280 = vmatprep.mubr.f32.mxu0 0.0
    %281 = vmatmul.mubr.f32.gmra.mrb[0].mxu0 %v190
    %v282 = vpop.f32.mrb[0].mxu0
    %v283 = vadd.f32 %v214, %v282
    %v284 = vpop.f32.mrb[0].mxu0
    %285 = vdwg.mxu0
    %v286 = vmax.f32 %v283, 0.0
    %v287 = vld [vmem:[#allocation8] sm:$0xff]
    %v288 = vld [vmem:[#allocation8 + $0x8] sm:$0xff]
    %v289 = vld [vmem:[#allocation8 + $0x10] sm:$0xff]
    %v290 = vld [vmem:[#allocation8 + $0x18] sm:$0xff]
    %v291 = vld [vmem:[#allocation8 + $0x20] sm:$0xff]
    %v292 = vld [vmem:[#allocation8 + $0x28] sm:$0xff]
    %v293 = vld [vmem:[#allocation8 + $0x30] sm:$0xff]
    %v294 = vld [vmem:[#allocation8 + $0x38] sm:$0xff]
    %v295 = vld [vmem:[#allocation8 + $0x40] sm:$0xff]
    %v296 = vld [vmem:[#allocation8 + $0x48] sm:$0xff]
    %v297 = vld [vmem:[#allocation8 + $0x50] sm:$0xff]
    %v298 = vld [vmem:[#allocation8 + $0x58] sm:$0xff]
    %v299 = vld [vmem:[#allocation8 + $0x60] sm:$0xff]
    %v300 = vld [vmem:[#allocation8 + $0x68] sm:$0xff]
    %v301 = vld [vmem:[#allocation8 + $0x70] sm:$0xff]
    %v302 = vld [vmem:[#allocation8 + $0x78] sm:$0xff]
    %v303 = vld [vmem:[%s6] sm:$0x1]
    %v305 = vlaneseq
    %v306 = vshrl.u32 %v305, 7
    %v307 = vsub.s32 0, %v306
    %v308 = vrot.slane %v303, %v307
    %310 = vmatprep.subr.mxu0 0.0
    %311 = vmatpush1.msra.mxu0 %v287
    %312 = vmatprep.subr.mxu0 0.0
    %313 = vmatpush1.msra.mxu0 %v288
    %314 = vmatprep.subr.mxu0 0.0
    %315 = vmatpush1.msra.mxu0 %v289
    %316 = vmatprep.subr.mxu0 0.0
    %317 = vmatpush1.msra.mxu0 %v290
    %318 = vmatprep.subr.mxu0 0.0
    %319 = vmatpush1.msra.mxu0 %v291
    %320 = vmatprep.subr.mxu0 0.0
    %321 = vmatpush1.msra.mxu0 %v292
    %322 = vmatprep.subr.mxu0 0.0
    %323 = vmatpush1.msra.mxu0 %v293
    %324 = vmatprep.subr.mxu0 0.0
    %325 = vmatpush1.msra.mxu0 %v294
    %326 = vmatprep.subr.mxu0 0.0
    %327 = vmatpush1.msra.mxu0 %v295
    %328 = vmatprep.subr.mxu0 0.0
    %329 = vmatpush1.msra.mxu0 %v296
    %330 = vmatprep.subr.mxu0 0.0
    %331 = vmatpush1.msra.mxu0 %v297
    %332 = vmatprep.subr.mxu0 0.0
    %333 = vmatpush1.msra.mxu0 %v298
    %334 = vmatprep.subr.mxu0 0.0
    %335 = vmatpush1.msra.mxu0 %v299
    %336 = vmatprep.subr.mxu0 0.0
    %337 = vmatpush1.msra.mxu0 %v300
    %338 = vmatprep.subr.mxu0 0.0
    %339 = vmatpush1.msra.mxu0 %v301
    %340 = vmatprep.subr.mxu0 0.0
    %341 = vmatpush1.msra.mxu0 %v302
    %342 = vmatprep.subr.mxu0 0.0
    %343 = vmatpush1.msra.mxu0 0.0
    %344 = vmatprep.subr.mxu0 0.0
    %345 = vmatpush1.msra.mxu0 0.0
    %346 = vmatprep.subr.mxu0 0.0
    %347 = vmatpush1.msra.mxu0 0.0
    %348 = vmatprep.subr.mxu0 0.0
    %349 = vmatpush1.msra.mxu0 0.0
    %350 = vmatprep.subr.mxu0 0.0
    %351 = vmatpush1.msra.mxu0 0.0
    %352 = vmatprep.subr.mxu0 0.0
    %353 = vmatpush1.msra.mxu0 0.0
    %354 = vmatprep.subr.mxu0 0.0
    %355 = vmatpush1.msra.mxu0 0.0
    %356 = vmatprep.subr.mxu0 0.0
    %357 = vmatpush1.msra.mxu0 0.0
    %358 = vmatprep.subr.mxu0 0.0
    %359 = vmatpush1.msra.mxu0 0.0
    %360 = vmatprep.subr.mxu0 0.0
    %361 = vmatpush1.msra.mxu0 0.0
    %362 = vmatprep.subr.mxu0 0.0
    %363 = vmatpush1.msra.mxu0 0.0
    %364 = vmatprep.subr.mxu0 0.0
    %365 = vmatpush1.msra.mxu0 0.0
    %366 = vmatprep.subr.mxu0 0.0
    %367 = vmatpush1.msra.mxu0 0.0
    %368 = vmatprep.subr.mxu0 0.0
    %369 = vmatpush1.msra.mxu0 0.0
    %370 = vmatprep.subr.mxu0 0.0
    %371 = vmatpush1.msra.mxu0 0.0
    %372 = vmatprep.subr.mxu0 0.0
    %373 = vmatpush1.msra.mxu0 0.0
    %374 = vmatprep.mubr.f32.mxu0 0.0
    %375 = vmatmul.mubr.f32.gmra.mrb[0].mxu0 %v286
    %v376 = vpop.f32.mrb[0].mxu0
    %v377 = vadd.f32 %v308, %v376
    %v378 = vpop.f32.mrb[0].mxu0
    %379 = vdwg.mxu0
    %v380 = vmax.f32 %v377, 0.0
    %v381 = vld [vmem:[#allocation10] sm:$0xff]
    %v382 = vld [vmem:[#allocation10 + $0x8] sm:$0xff]
    %v383 = vld [vmem:[#allocation10 + $0x10] sm:$0xff]
    %v384 = vld [vmem:[#allocation10 + $0x18] sm:$0xff]
    %v385 = vld [vmem:[#allocation10 + $0x20] sm:$0xff]
    %v386 = vld [vmem:[#allocation10 + $0x28] sm:$0xff]
    %v387 = vld [vmem:[#allocation10 + $0x30] sm:$0xff]
    %v388 = vld [vmem:[#allocation10 + $0x38] sm:$0xff]
    %v389 = vld [vmem:[#allocation10 + $0x40] sm:$0xff]
    %v390 = vld [vmem:[#allocation10 + $0x48] sm:$0xff]
    %v391 = vld [vmem:[#allocation10 + $0x50] sm:$0xff]
    %v392 = vld [vmem:[#allocation10 + $0x58] sm:$0xff]
    %v393 = vld [vmem:[#allocation10 + $0x60] sm:$0xff]
    %v394 = vld [vmem:[#allocation10 + $0x68] sm:$0xff]
    %v395 = vld [vmem:[#allocation10 + $0x70] sm:$0xff]
    %v396 = vld [vmem:[#allocation10 + $0x78] sm:$0xff]
    %v397 = vld [vmem:[%s8] sm:$0x1]
    %v399 = vlaneseq
    %v400 = vshrl.u32 %v399, 7
    %v401 = vsub.s32 0, %v400
    %v402 = vrot.slane %v397, %v401
    %404 = vmatprep.subr.mxu0 0.0
    %405 = vmatpush1.msra.mxu0 %v381
    %406 = vmatprep.subr.mxu0 0.0
    %407 = vmatpush1.msra.mxu0 %v382
    %408 = vmatprep.subr.mxu0 0.0
    %409 = vmatpush1.msra.mxu0 %v383
    %410 = vmatprep.subr.mxu0 0.0
    %411 = vmatpush1.msra.mxu0 %v384
    %412 = vmatprep.subr.mxu0 0.0
    %413 = vmatpush1.msra.mxu0 %v385
    %414 = vmatprep.subr.mxu0 0.0
    %415 = vmatpush1.msra.mxu0 %v386
    %416 = vmatprep.subr.mxu0 0.0
    %417 = vmatpush1.msra.mxu0 %v387
    %418 = vmatprep.subr.mxu0 0.0
    %419 = vmatpush1.msra.mxu0 %v388
    %420 = vmatprep.subr.mxu0 0.0
    %421 = vmatpush1.msra.mxu0 %v389
    %422 = vmatprep.subr.mxu0 0.0
    %423 = vmatpush1.msra.mxu0 %v390
    %424 = vmatprep.subr.mxu0 0.0
    %425 = vmatpush1.msra.mxu0 %v391
    %426 = vmatprep.subr.mxu0 0.0
    %427 = vmatpush1.msra.mxu0 %v392
    %428 = vmatprep.subr.mxu0 0.0
    %429 = vmatpush1.msra.mxu0 %v393
    %430 = vmatprep.subr.mxu0 0.0
    %431 = vmatpush1.msra.mxu0 %v394
    %432 = vmatprep.subr.mxu0 0.0
    %433 = vmatpush1.msra.mxu0 %v395
    %434 = vmatprep.subr.mxu0 0.0
    %435 = vmatpush1.msra.mxu0 %v396
    %436 = vmatprep.subr.mxu0 0.0
    %437 = vmatpush1.msra.mxu0 0.0
    %438 = vmatprep.subr.mxu0 0.0
    %439 = vmatpush1.msra.mxu0 0.0
    %440 = vmatprep.subr.mxu0 0.0
    %441 = vmatpush1.msra.mxu0 0.0
    %442 = vmatprep.subr.mxu0 0.0
    %443 = vmatpush1.msra.mxu0 0.0
    %444 = vmatprep.subr.mxu0 0.0
    %445 = vmatpush1.msra.mxu0 0.0
    %446 = vmatprep.subr.mxu0 0.0
    %447 = vmatpush1.msra.mxu0 0.0
    %448 = vmatprep.subr.mxu0 0.0
    %449 = vmatpush1.msra.mxu0 0.0
    %450 = vmatprep.subr.mxu0 0.0
    %451 = vmatpush1.msra.mxu0 0.0
    %452 = vmatprep.subr.mxu0 0.0
    %453 = vmatpush1.msra.mxu0 0.0
    %454 = vmatprep.subr.mxu0 0.0
    %455 = vmatpush1.msra.mxu0 0.0
    %456 = vmatprep.subr.mxu0 0.0
    %457 = vmatpush1.msra.mxu0 0.0
    %458 = vmatprep.subr.mxu0 0.0
    %459 = vmatpush1.msra.mxu0 0.0
    %460 = vmatprep.subr.mxu0 0.0
    %461 = vmatpush1.msra.mxu0 0.0
    %462 = vmatprep.subr.mxu0 0.0
    %463 = vmatpush1.msra.mxu0 0.0
    %464 = vmatprep.subr.mxu0 0.0
    %465 = vmatpush1.msra.mxu0 0.0
    %466 = vmatprep.subr.mxu0 0.0
    %467 = vmatpush1.msra.mxu0 0.0
    %468 = vmatprep.mubr.f32.mxu0 0.0
    %469 = vmatmul.mubr.f32.gmra.mrb[0].mxu0 %v380
    %v470 = vpop.f32.mrb[0].mxu0
    %v471 = vadd.f32 %v402, %v470
    %v472 = vpop.f32.mrb[0].mxu0
    %473 = vdwg.mxu0
    %474 = vst [vmem:[#allocation11] sm:$0xff] %v471
    // Predicated region
    $region58: #{tpu_custom_call.1} parent=1 // pred_check
      _
    $region59: #{tpu_custom_call.1} parent=1 // pred_check_branch
      %476 = sbr.rel (0) target = $region61
    $region60: #{tpu_custom_call.1} parent=1 // pred_region
      %s478 = ssub.s32 128, 128
      %479 = vsyncadd [#allocation4], %s478
      %s481 = sshll.u32 [#allocation11], 4
      %s482 = int_to_ptr.vmem [resolvable:$true] %s481
      %484 = dma.vmem_to_hbm [thread:$0]  %s482, 128, %s9, [#allocation4]
    $region61: #{tpu_custom_call.1} parent=1 // pred_fallthru
      _
    // Predicated region
    $region62: #{tpu_custom_call.1} parent=1 // pred_check
      _
    $region63: #{tpu_custom_call.1} parent=1 // pred_check_branch
      %486 = sbr.rel (0) target = $region65
    $region64: #{tpu_custom_call.1} parent=1 // pred_region
      %487 = dma.done [#allocation4], 128
    $region65: #{tpu_custom_call.1} parent=1 // pred_fallthru
      _
    %488 = vsyncpa [#allocation3], 1
    %489 = vsyncpa [#allocation6], 1
    %490 = vsyncpa [#allocation9], 1
    %491 = vsyncpa [#allocation4], 1

</llo_original>
